<compile_context>
chip_gen: v7x
topology: tpu7x:2x2x1
jax: 0.10.0
libtpu: 0.0.40
codegen_flags: <defaults>
</compile_context>

<pallas_src>
import functools

import jax
import jax.numpy as jnp
from jax import lax
from jax.experimental import pallas as pl
from jax.experimental.pallas import tpu as pltpu

_EPS = 1e-6


def _stabilize(v):
    # zennit-style stabilize: add +/- eps depending on sign (never zero).
    return v + jnp.where(v >= 0.0, _EPS, -_EPS)


def _round_up(v, m):
    return (v + m - 1) // m * m


def _softmax_ixg_kernel(x_ref, w_ref, wa_ref, b_ref, y_ref, r_ref, *,
                        alpha, beta, approx_recip):
    """One batch tile of the fused forward + alpha-beta IxG relevance pass."""
    x = x_ref[...].astype(jnp.float32)        # [tb, Din]
    w = w_ref[...].astype(jnp.float32)        # [Dout, Din]  (VMEM-resident)
    wa = wa_ref[...].astype(jnp.float32)      # [Dout, Din]  = |W| (resident)
    b = b_ref[...].astype(jnp.float32)        # [1, Dout]

    xa = jnp.abs(x)

    # Contract on Din directly (x @ W^T) without materializing a transpose.
    dn_t = (((1,), (1,)), ((), ()))
    z = lax.dot_general(x, w, dn_t, preferred_element_type=jnp.float32)    # x @ W^T
    za = lax.dot_general(xa, wa, dn_t, preferred_element_type=jnp.float32)  # |x| @ |W|^T

    # --- module forward -------------------------------------------------
    y = z + b
    y_ref[...] = y.astype(y_ref.dtype)

    # --- root_fn: softmax(y) is the relevance seed ------------------------
    y_max = jnp.max(y, axis=-1, keepdims=True)
    ey = jnp.exp(y - y_max)
    denom = jnp.sum(ey, axis=-1, keepdims=True)
    if approx_recip:
        g = ey * pl.reciprocal(denom, approx=True)
    else:
        g = ey / denom

    # --- collapsed output_mod / gradient_mod -------------------------------
    o_pos = 0.5 * (z + za)          # = x+ W+^T + x- W-^T
    o_neg = 0.5 * (z - za)          # = x+ W-^T + x- W+^T
    sp = _stabilize(o_pos)
    sn = _stabilize(o_neg)
    if approx_recip:
        g_pos = g * pl.reciprocal(sp, approx=True)
        g_neg = g * pl.reciprocal(sn, approx=True)
    else:
        g_pos = g / sp
        g_neg = g / sn

    # --- collapsed VJPs: stack g_pos/g_neg along M so W and |W| are each
    # pushed through the MXU once per tile (2 matmuls instead of 4). --------
    gg = jnp.concatenate([g_pos, g_neg], axis=0)            # [2*tb, Dout]
    dn = (((1,), (0,)), ((), ()))
    c_w = lax.dot_general(gg, w, dn, preferred_element_type=jnp.float32)    # gg @ W
    c_wa = lax.dot_general(gg, wa, dn, preferred_element_type=jnp.float32)  # gg @ |W|

    tb = x.shape[0]
    r_pos = 0.5 * (x * c_w[:tb] + xa * c_wa[:tb])   # = R1 + R2
    r_neg = 0.5 * (x * c_w[tb:] - xa * c_wa[tb:])   # = R3 + R4

    r_ref[...] = (alpha * r_pos - beta * r_neg).astype(r_ref.dtype)


def input_ref_xg_softmax_alpha_beta(x, w, b, *, alpha=2.0, beta=1.0,
                                    tile_b=None, approx_recip=False):
    """x: [B, Din] f32, w: [Dout, Din] f32 (nn.Linear layout), b: [1, Dout] f32.

    Returns (y, relevance): y = x @ W^T + b  and the alpha-beta IxG relevance.
    """
    x = jnp.asarray(x, jnp.float32)
    w = jnp.asarray(w, jnp.float32)
    b = jnp.asarray(b, jnp.float32).reshape(1, -1)

    B, Din = x.shape
    Dout = w.shape[0]

    if tile_b is None:
        tile_b = min(128, _round_up(B, 8))
    tile_b = max(8, _round_up(int(tile_b), 8))

    B_pad = _round_up(B, tile_b)
    if B_pad != B:
        x = jnp.pad(x, ((0, B_pad - B), (0, 0)))

    # |W| computed once outside the kernel; it stays VMEM-resident across all
    # batch tiles (constant index_map), so no per-tile clamp/abs on W.
    wa = jnp.abs(w)

    grid = (pl.cdiv(B_pad, tile_b),)

    # Conservative VMEM budget, capped at 64 MiB (safe on v7x per-TC VMEM).
    est_bytes = 4 * (4 * Dout * Din
                     + 6 * tile_b * (Din + Dout)
                     + 2 * Dout
                     + 16 * tile_b * max(Din, Dout))
    vmem_limit = min(64 * 1024 * 1024, max(32 * 1024 * 1024, 2 * est_bytes))

    kernel = functools.partial(_softmax_ixg_kernel,
                               alpha=float(alpha), beta=float(beta),
                               approx_recip=bool(approx_recip))

    y, r = pl.pallas_call(
        kernel,
        out_shape=(
            jax.ShapeDtypeStruct((B_pad, Dout), jnp.float32),
            jax.ShapeDtypeStruct((B_pad, Din), jnp.float32),
        ),
        grid=grid,
        in_specs=[
            pl.BlockSpec((tile_b, Din), lambda i: (i, 0)),   # x tile (pipelined)
            pl.BlockSpec((Dout, Din), lambda i: (0, 0)),     # W     (resident)
            pl.BlockSpec((Dout, Din), lambda i: (0, 0)),     # |W|   (resident)
            pl.BlockSpec((1, Dout), lambda i: (0, 0)),       # bias  (resident)
        ],
        out_specs=(
            pl.BlockSpec((tile_b, Dout), lambda i: (i, 0)),  # y tile
            pl.BlockSpec((tile_b, Din), lambda i: (i, 0)),   # R tile
        ),
        compiler_params=pltpu.CompilerParams(
            dimension_semantics=("parallel",),
            vmem_limit_bytes=vmem_limit,
        ),
    )(x, w, wa, b)

    if B_pad != B:
        y = y[:B]
        r = r[:B]
    return y, r


def _reference(x, w, b, alpha=2.0, beta=1.0):
    # Pure-JAX reference using the explicit (un-collapsed) alpha-beta rule.
    y = x @ w.T + b
    g = jax.nn.softmax(y, axis=-1)
    xp, xn = jnp.maximum(x, 0.0), jnp.minimum(x, 0.0)
    wp, wn = jnp.maximum(w, 0.0), jnp.minimum(w, 0.0)
    o_pos = xp @ wp.T + xn @ wn.T
    o_neg = xp @ wn.T + xn @ wp.T
    g_pos = g / _stabilize(o_pos)
    g_neg = g / _stabilize(o_neg)
    r1 = xp * (g_pos @ wp)
    r2 = xn * (g_pos @ wn)
    r3 = xp * (g_neg @ wn)
    r4 = xn * (g_neg @ wp)
    return y, alpha * (r1 + r2) - beta * (r3 + r4)


if __name__ == "__main__":
    key = jax.random.PRNGKey(0)
    kx1, kw1, kb1, kx2, kw2, kb2 = jax.random.split(key, 6)

    # Case 1: lane-aligned dims, batch tiled into 4 pipelined grid steps.
    B, Din, Dout = 64, 128, 128
    x1 = jax.random.normal(kx1, (B, Din), dtype=jnp.float32)
    w1 = jax.random.normal(kw1, (Dout, Din), dtype=jnp.float32) * 0.1
    b1 = jax.random.normal(kb1, (1, Dout), dtype=jnp.float32) * 0.1

    y1, r1 = input_ref_xg_softmax_alpha_beta(x1, w1, b1, alpha=2.0, beta=1.0,
                                             tile_b=16)
    jax.block_until_ready((y1, r1))
    y1_ref, r1_ref = _reference(x1, w1, b1, alpha=2.0, beta=1.0)
    assert jnp.allclose(y1, y1_ref, atol=1e-4, rtol=1e-4)
    assert jnp.allclose(r1, r1_ref, atol=1e-4, rtol=1e-4)

    # Case 2: ragged batch + non-128 lane dims (exercises the padding path).
    B2, Din2, Dout2 = 10, 32, 48
    x2 = jax.random.normal(kx2, (B2, Din2), dtype=jnp.float32)
    w2 = jax.random.normal(kw2, (Dout2, Din2), dtype=jnp.float32) * 0.1
    b2 = jax.random.normal(kb2, (1, Dout2), dtype=jnp.float32) * 0.1

    y2, r2 = input_ref_xg_softmax_alpha_beta(x2, w2, b2, alpha=2.0, beta=1.0)
    jax.block_until_ready((y2, r2))
    y2_ref, r2_ref = _reference(x2, w2, b2, alpha=2.0, beta=1.0)
    assert jnp.allclose(y2, y2_ref, atol=1e-4, rtol=1e-4)
    assert jnp.allclose(r2, r2_ref, atol=1e-4, rtol=1e-4)

    print("KERNEL_OK")
</pallas_src>

<mosaic_0001>
module attributes {stable_mosaic.version = 11 : i64} {
  func.func @_softmax_ixg_kernel(%arg0: i32, %arg1: memref<16x128xf32, #tpu.memory_space<vmem>>, %arg2: memref<128x128xf32, #tpu.memory_space<vmem>>, %arg3: memref<128x128xf32, #tpu.memory_space<vmem>>, %arg4: memref<1x128xf32, #tpu.memory_space<vmem>>, %arg5: memref<16x128xf32, #tpu.memory_space<vmem>>, %arg6: memref<16x128xf32, #tpu.memory_space<vmem>>) attributes {dimension_semantics = [#tpu.dimension_semantics<parallel>], iteration_bounds = array<i64: 4>, scalar_prefetch = 0 : i64, scratch_operands = 0 : i64, tpu.core_type = #tpu.core_type<tc>, window_params = [{transform_indices = @transform_0, window_bounds = array<i64: 16, 128>}, {pipeline_mode = #tpu.pipeline_mode<synchronous>, transform_indices = @transform_1, window_bounds = array<i64: 128, 128>}, {pipeline_mode = #tpu.pipeline_mode<synchronous>, transform_indices = @transform_2, window_bounds = array<i64: 128, 128>}, {pipeline_mode = #tpu.pipeline_mode<synchronous>, transform_indices = @transform_3, window_bounds = array<i64: 1, 128>}, {transform_indices = @transform_4, window_bounds = array<i64: 16, 128>}, {transform_indices = @transform_5, window_bounds = array<i64: 16, 128>}]} {
    %c0 = arith.constant 0 : index
    %c0_0 = arith.constant 0 : index
    %0 = vector.load %arg1[%c0, %c0_0] : memref<16x128xf32, #tpu.memory_space<vmem>>, vector<16x128xf32>
    %c0_1 = arith.constant 0 : index
    %c0_2 = arith.constant 0 : index
    %1 = vector.load %arg2[%c0_1, %c0_2] : memref<128x128xf32, #tpu.memory_space<vmem>>, vector<128x128xf32>
    %c0_3 = arith.constant 0 : index
    %c0_4 = arith.constant 0 : index
    %2 = vector.load %arg3[%c0_3, %c0_4] : memref<128x128xf32, #tpu.memory_space<vmem>>, vector<128x128xf32>
    %c0_5 = arith.constant 0 : index
    %c0_6 = arith.constant 0 : index
    %3 = vector.load %arg4[%c0_5, %c0_6] : memref<1x128xf32, #tpu.memory_space<vmem>>, vector<1x128xf32>
    %4 = math.absf %0 : vector<16x128xf32>
    %cst = arith.constant dense<0.000000e+00> : vector<16x128xf32>
    %5 = tpu.matmul %0, %1, %cst {dimension_numbers = #tpu.dot_dimension_numbers<[1], [1], [0], [0], [0, 0, 1, 0], [], []>} : vector<16x128xf32>, vector<128x128xf32>, vector<16x128xf32> -> vector<16x128xf32>
    %cst_7 = arith.constant dense<0.000000e+00> : vector<16x128xf32>
    %6 = tpu.matmul %4, %2, %cst_7 {dimension_numbers = #tpu.dot_dimension_numbers<[1], [1], [0], [0], [0, 0, 1, 0], [], []>} : vector<16x128xf32>, vector<128x128xf32>, vector<16x128xf32> -> vector<16x128xf32>
    %7 = vector.broadcast %3 : vector<1x128xf32> to vector<16x128xf32>
    %8 = arith.addf %5, %7 : vector<16x128xf32>
    %c0_8 = arith.constant 0 : index
    %c0_9 = arith.constant 0 : index
    %9 = vector.load %arg5[%c0_8, %c0_9] : memref<16x128xf32, #tpu.memory_space<vmem>>, vector<16x128xf32>
    tpu.vector_store %arg5[%c0_8, %c0_9], %8 {strides = array<i32>} : memref<16x128xf32, #tpu.memory_space<vmem>>, vector<16x128xf32>,
    %cst_10 = arith.constant dense<0xFF800000> : vector<16xf32>
    %10 = vector.multi_reduction <maximumf>, %8, %cst_10 [1] : vector<16x128xf32> to vector<16xf32>
    %11 = vector.shape_cast %10 : vector<16xf32> to vector<16x1xf32>
    %12 = vector.broadcast %11 : vector<16x1xf32> to vector<16x128xf32>
    %13 = arith.subf %8, %12 : vector<16x128xf32>
    %14 = math.exp %13 : vector<16x128xf32>
    %cst_11 = arith.constant dense<0.000000e+00> : vector<16xf32>
    %15 = vector.multi_reduction <add>, %14, %cst_11 [1] : vector<16x128xf32> to vector<16xf32>
    %16 = vector.shape_cast %15 : vector<16xf32> to vector<16x1xf32>
    %17 = vector.broadcast %16 : vector<16x1xf32> to vector<16x128xf32>
    %18 = arith.divf %14, %17 : vector<16x128xf32>
    %19 = arith.addf %5, %6 : vector<16x128xf32>
    %cst_12 = arith.constant 5.000000e-01 : f32
    %20 = vector.broadcast %cst_12 : f32 to vector<16x128xf32>
    %21 = arith.mulf %20, %19 : vector<16x128xf32>
    %22 = arith.subf %5, %6 : vector<16x128xf32>
    %cst_13 = arith.constant 5.000000e-01 : f32
    %23 = vector.broadcast %cst_13 : f32 to vector<16x128xf32>
    %24 = arith.mulf %23, %22 : vector<16x128xf32>
    %cst_14 = arith.constant 0.000000e+00 : f32
    %25 = vector.broadcast %cst_14 : f32 to vector<16x128xf32>
    %26 = arith.cmpf oge, %21, %25 : vector<16x128xf32>
    %cst_15 = arith.constant 9.99999997E-7 : f32
    %cst_16 = arith.constant -9.99999997E-7 : f32
    %27 = vector.broadcast %cst_15 : f32 to vector<16x128xf32>
    %28 = vector.broadcast %cst_16 : f32 to vector<16x128xf32>
    %29 = arith.select %26, %27, %28 : vector<16x128xi1>, vector<16x128xf32>
    %30 = arith.addf %21, %29 : vector<16x128xf32>
    %cst_17 = arith.constant 0.000000e+00 : f32
    %31 = vector.broadcast %cst_17 : f32 to vector<16x128xf32>
    %32 = arith.cmpf oge, %24, %31 : vector<16x128xf32>
    %cst_18 = arith.constant 9.99999997E-7 : f32
    %cst_19 = arith.constant -9.99999997E-7 : f32
    %33 = vector.broadcast %cst_18 : f32 to vector<16x128xf32>
    %34 = vector.broadcast %cst_19 : f32 to vector<16x128xf32>
    %35 = arith.select %32, %33, %34 : vector<16x128xi1>, vector<16x128xf32>
    %36 = arith.addf %24, %35 : vector<16x128xf32>
    %37 = arith.divf %18, %30 : vector<16x128xf32>
    %38 = arith.divf %18, %36 : vector<16x128xf32>
    %39 = tpu.concatenate %37, %38 in 0 : vector<16x128xf32>, vector<16x128xf32> -> vector<32x128xf32>
    %cst_20 = arith.constant dense<0.000000e+00> : vector<32x128xf32>
    %40 = tpu.matmul %39, %1, %cst_20 {dimension_numbers = #tpu.dot_dimension_numbers<[1], [0], [0], [1], [0, 0, 1, 1], [], []>} : vector<32x128xf32>, vector<128x128xf32>, vector<32x128xf32> -> vector<32x128xf32>
    %cst_21 = arith.constant dense<0.000000e+00> : vector<32x128xf32>
    %41 = tpu.matmul %39, %2, %cst_21 {dimension_numbers = #tpu.dot_dimension_numbers<[1], [0], [0], [1], [0, 0, 1, 1], [], []>} : vector<32x128xf32>, vector<128x128xf32>, vector<32x128xf32> -> vector<32x128xf32>
    %42 = vector.extract_strided_slice %40 {offsets = [0, 0], sizes = [16, 128], strides = [1, 1]} : vector<32x128xf32> to vector<16x128xf32>
    %43 = arith.mulf %0, %42 : vector<16x128xf32>
    %44 = vector.extract_strided_slice %41 {offsets = [0, 0], sizes = [16, 128], strides = [1, 1]} : vector<32x128xf32> to vector<16x128xf32>
    %45 = arith.mulf %4, %44 : vector<16x128xf32>
    %46 = arith.addf %43, %45 : vector<16x128xf32>
    %cst_22 = arith.constant 5.000000e-01 : f32
    %47 = vector.broadcast %cst_22 : f32 to vector<16x128xf32>
    %48 = arith.mulf %47, %46 : vector<16x128xf32>
    %49 = vector.extract_strided_slice %40 {offsets = [16, 0], sizes = [16, 128], strides = [1, 1]} : vector<32x128xf32> to vector<16x128xf32>
    %50 = arith.mulf %0, %49 : vector<16x128xf32>
    %51 = vector.extract_strided_slice %41 {offsets = [16, 0], sizes = [16, 128], strides = [1, 1]} : vector<32x128xf32> to vector<16x128xf32>
    %52 = arith.mulf %4, %51 : vector<16x128xf32>
    %53 = arith.subf %50, %52 : vector<16x128xf32>
    %cst_23 = arith.constant 5.000000e-01 : f32
    %54 = vector.broadcast %cst_23 : f32 to vector<16x128xf32>
    %55 = arith.mulf %54, %53 : vector<16x128xf32>
    %cst_24 = arith.constant 2.000000e+00 : f32
    %56 = vector.broadcast %cst_24 : f32 to vector<16x128xf32>
    %57 = arith.mulf %56, %48 : vector<16x128xf32>
    %cst_25 = arith.constant 1.000000e+00 : f32
    %58 = vector.broadcast %cst_25 : f32 to vector<16x128xf32>
    %59 = arith.mulf %58, %55 : vector<16x128xf32>
    %60 = arith.subf %57, %59 : vector<16x128xf32>
    %c0_26 = arith.constant 0 : index
    %c0_27 = arith.constant 0 : index
    %61 = vector.load %arg6[%c0_26, %c0_27] : memref<16x128xf32, #tpu.memory_space<vmem>>, vector<16x128xf32>
    tpu.vector_store %arg6[%c0_26, %c0_27], %60 {strides = array<i32>} : memref<16x128xf32, #tpu.memory_space<vmem>>, vector<16x128xf32>,
    return
  }
  func.func @transform_0(%arg0: i32) -> (i32, i32) {
    %c0_i32 = arith.constant 0 : i32
    %c0_i32_0 = arith.constant 0 : i32
    return %arg0, %c0_i32 : i32, i32
  }
  func.func @transform_1(%arg0: i32) -> (i32, i32) {
    %c0_i32 = arith.constant 0 : i32
    %c0_i32_0 = arith.constant 0 : i32
    %c0_i32_1 = arith.constant 0 : i32
    return %c0_i32, %c0_i32_0 : i32, i32
  }
  func.func @transform_2(%arg0: i32) -> (i32, i32) {
    %c0_i32 = arith.constant 0 : i32
    %c0_i32_0 = arith.constant 0 : i32
    %c0_i32_1 = arith.constant 0 : i32
    return %c0_i32, %c0_i32_0 : i32, i32
  }
  func.func @transform_3(%arg0: i32) -> (i32, i32) {
    %c0_i32 = arith.constant 0 : i32
    %c0_i32_0 = arith.constant 0 : i32
    %c0_i32_1 = arith.constant 0 : i32
    return %c0_i32, %c0_i32_0 : i32, i32
  }
  func.func @transform_4(%arg0: i32) -> (i32, i32) {
    %c0_i32 = arith.constant 0 : i32
    %c0_i32_0 = arith.constant 0 : i32
    return %arg0, %c0_i32 : i32, i32
  }
  func.func @transform_5(%arg0: i32) -> (i32, i32) {
    %c0_i32 = arith.constant 0 : i32
    %c0_i32_0 = arith.constant 0 : i32
    return %arg0, %c0_i32 : i32, i32
  }
}

</mosaic_0001>

<llo_original>
// kernel: tpu_custom_call.1
$region0: #{tpu_custom_call.1}
  #allocation0 [shape = 'u32[]', space=smem, size = 0x4, offset = 0x4, fixed_abs, tag = 'smem constant byte address 0x4 - core index']
  #allocation1 [shape = 'u32[144,128]{1,0:T(1,128)}', space=vmem, size = 0x12000, scoped, tag = 'internal scratch']
  %s0 = inlined_call_operand.hbm [shape: f32[64,128], index: 0, kind: input, shape index: {}]
  %s1 = inlined_call_operand.hbm [shape: f32[128,128], index: 1, kind: input, shape index: {}]
  %s2 = inlined_call_operand.hbm [shape: f32[128,128], index: 2, kind: input, shape index: {}]
  %s3 = inlined_call_operand.vmem [shape: f32[1,128], index: 3, kind: input, shape index: {}]
  %s4 = inlined_call_operand.hbm [shape: f32[64,128], index: 4, kind: output, shape index: {0}]
  %s5 = inlined_call_operand.hbm [shape: f32[64,128], index: 5, kind: output, shape index: {1}]
  %6 = xla_tuple %s4, %s5
  %s7 = sld [smem:[#allocation0]]
  $region69: #{tpu_custom_call.1} parent=0
    _
  %s9 = ssub.s32 1, %s7
  %s10 = scalar_select 0, %s9, %s7
  $region1: #{tpu_custom_call.1} parent=0
    #allocation2 [shape = 'u8[16384]{0}', space=vmem, size = 0x4000, scoped, tag = 'input window, operand 0']
    #allocation3 [shape = 's32[2]{0}', space=sflag, size = 0x8, scoped, tag = 'scoped memory for tpu_custom_call.1']
    #allocation4 [shape = 's32[2]{0}', space=sflag, size = 0x8, scoped, tag = 'scoped memory for tpu_custom_call.1']
    #allocation5 [shape = 'u8[65536]{0}', space=vmem, size = 0x10000, scoped, tag = 'input window, operand 1, single buffered']
    #allocation6 [shape = 's32[1]{0}', space=sflag, size = 0x4, scoped, tag = 'scoped memory for tpu_custom_call.1']
    #allocation7 [shape = 'u8[65536]{0}', space=vmem, size = 0x10000, scoped, tag = 'input window, operand 2, single buffered']
    #allocation8 [shape = 'u8[16384]{0}', space=vmem, size = 0x4000, scoped, tag = 'output window, operand 0']
    #allocation9 [shape = 'u8[16384]{0}', space=vmem, size = 0x4000, scoped, tag = 'output window, operand 1']
    #allocation10 [shape = 's32[2]{0}', space=sflag, size = 0x8, scoped, tag = 'scoped memory for tpu_custom_call.1']
    %11 = vsyncpa [#allocation3], 0
    %s12 = scalar_lea.sflag [#allocation3], 1
    %13 = vsyncpa %s12, 0
    %14 = vsyncpa [#allocation6], 0
    %15 = vsyncpa [#allocation4], 0
    %s16 = scalar_lea.sflag [#allocation4], 1
    %17 = vsyncpa %s16, 0
    %18 = vsyncpa [#allocation10], 0
    %s19 = scalar_lea.sflag [#allocation10], 1
    %20 = vsyncpa %s19, 0
    loop: start=0, step=1, limit=6
    $region2: #{tpu_custom_call.1} parent=1 // loop_pre_header
      _
    $region3: #{tpu_custom_call.1} parent=1 // loop_header
      %s22 = sphi 0, %s26
      %p23 = scmp.ge.s32.totalorder %s22, 6
      %s32 = sphi 0, %s34
      %s35 = sphi 0, %s32
      %s36 = sphi 0, %s35
      %s52 = sphi 0, %s36
      %s56 = sphi 0, %s56
      %s58 = sphi 0, %s56
      %s59 = sphi 0, %s58
      %s73 = sphi 0, %s59
      %s77 = sphi 0, %s77
      %s79 = sphi 0, %s77
      %s80 = sphi 0, %s79
      %s94 = sphi 0, %s80
      %s98 = sphi 0, %s98
      %s100 = sphi 0, %s98
      %s101 = sphi 0, %s100
      %s115 = sphi 0, %s101
      %s121 = sphi 0, %s123
      %s124 = sphi 0, %s121
      %s125 = sphi 0, %s124
      %s141 = sphi 0, %s125
      %s147 = sphi 0, %s149
      %s150 = sphi 0, %s147
      %s151 = sphi 0, %s150
      %s167 = sphi 0, %s151
    $region4: #{tpu_custom_call.1} parent=1 // loop_header_branch
      %25 = sbr.rel (%p23) target = $region8
    $region5: #{tpu_custom_call.1} parent=1 // loop_body
      %s27 = ssub.s32 %s22, 1
      %s28 = ssub.s32 %s22, 2
      %s29 = sadd.s32 %s22, 1
      %s30 = ssub.s32 %s22, %s29
      %p31 = scmp.eq.s32.totalorder %s30, 0
      %s33 = sadd.s32 %s32, 1
      %s34 = scalar_select %p31, %s32, %s33
      %p37 = pneg %p31
      %p38 = scmp.eq.s32.totalorder %s22, 3
      %p39 = por %p37, %p38
      %p40 = scmp.ne.s32.totalorder %s32, %s35
      %p41 = scmp.eq.s32.totalorder %s22, 0
      %p42 = por %p40, %p41
      %p43 = scmp.ne.s32.totalorder %s32, %s35
      %p44 = scmp.eq.s32.totalorder %s27, 3
      %p45 = por %p43, %p44
      %p46 = scmp.ne.s32.totalorder %s35, %s36
      %p47 = scmp.eq.s32.totalorder %s27, 0
      %p48 = por %p46, %p47
      %p49 = scmp.ne.s32.totalorder %s35, %s36
      %p50 = scmp.eq.s32.totalorder %s28, 3
      %p51 = por %p49, %p50
      %p53 = scmp.ne.s32.totalorder %s36, %s52
      %p54 = scmp.eq.s32.totalorder %s28, 0
      %p55 = por %p53, %p54
      %s57 = sadd.s32 %s56, 1
      %p60 = scmp.eq.s32.totalorder %s22, 3
      %p61 = scmp.ne.s32.totalorder %s56, %s58
      %p62 = scmp.eq.s32.totalorder %s22, 0
      %p63 = por %p61, %p62
      %p64 = scmp.ne.s32.totalorder %s56, %s58
      %p65 = scmp.eq.s32.totalorder %s27, 3
      %p66 = por %p64, %p65
      %p67 = scmp.ne.s32.totalorder %s58, %s59
      %p68 = scmp.eq.s32.totalorder %s27, 0
      %p69 = por %p67, %p68
      %p70 = scmp.ne.s32.totalorder %s58, %s59
      %p71 = scmp.eq.s32.totalorder %s28, 3
      %p72 = por %p70, %p71
      %p74 = scmp.ne.s32.totalorder %s59, %s73
      %p75 = scmp.eq.s32.totalorder %s28, 0
      %p76 = por %p74, %p75
      %s78 = sadd.s32 %s77, 1
      %p81 = scmp.eq.s32.totalorder %s22, 3
      %p82 = scmp.ne.s32.totalorder %s77, %s79
      %p83 = scmp.eq.s32.totalorder %s22, 0
      %p84 = por %p82, %p83
      %p85 = scmp.ne.s32.totalorder %s77, %s79
      %p86 = scmp.eq.s32.totalorder %s27, 3
      %p87 = por %p85, %p86
      %p88 = scmp.ne.s32.totalorder %s79, %s80
      %p89 = scmp.eq.s32.totalorder %s27, 0
      %p90 = por %p88, %p89
      %p91 = scmp.ne.s32.totalorder %s79, %s80
      %p92 = scmp.eq.s32.totalorder %s28, 3
      %p93 = por %p91, %p92
      %p95 = scmp.ne.s32.totalorder %s80, %s94
      %p96 = scmp.eq.s32.totalorder %s28, 0
      %p97 = por %p95, %p96
      %s99 = sadd.s32 %s98, 1
      %p102 = scmp.eq.s32.totalorder %s22, 3
      %p103 = scmp.ne.s32.totalorder %s98, %s100
      %p104 = scmp.eq.s32.totalorder %s22, 0
      %p105 = por %p103, %p104
      %p106 = scmp.ne.s32.totalorder %s98, %s100
      %p107 = scmp.eq.s32.totalorder %s27, 3
      %p108 = por %p106, %p107
      %p109 = scmp.ne.s32.totalorder %s100, %s101
      %p110 = scmp.eq.s32.totalorder %s27, 0
      %p111 = por %p109, %p110
      %p112 = scmp.ne.s32.totalorder %s100, %s101
      %p113 = scmp.eq.s32.totalorder %s28, 3
      %p114 = por %p112, %p113
      %p116 = scmp.ne.s32.totalorder %s101, %s115
      %p117 = scmp.eq.s32.totalorder %s28, 0
      %p118 = por %p116, %p117
      %s119 = ssub.s32 %s22, %s29
      %p120 = scmp.eq.s32.totalorder %s119, 0
      %s122 = sadd.s32 %s121, 1
      %s123 = scalar_select %p120, %s121, %s122
      %p126 = pneg %p120
      %p127 = scmp.eq.s32.totalorder %s22, 3
      %p128 = por %p126, %p127
      %p129 = scmp.ne.s32.totalorder %s121, %s124
      %p130 = scmp.eq.s32.totalorder %s22, 0
      %p131 = por %p129, %p130
      %p132 = scmp.ne.s32.totalorder %s121, %s124
      %p133 = scmp.eq.s32.totalorder %s27, 3
      %p134 = por %p132, %p133
      %p135 = scmp.ne.s32.totalorder %s124, %s125
      %p136 = scmp.eq.s32.totalorder %s27, 0
      %p137 = por %p135, %p136
      %p138 = scmp.ne.s32.totalorder %s124, %s125
      %p139 = scmp.eq.s32.totalorder %s28, 3
      %p140 = por %p138, %p139
      %p142 = scmp.ne.s32.totalorder %s125, %s141
      %p143 = scmp.eq.s32.totalorder %s28, 0
      %p144 = por %p142, %p143
      %s145 = ssub.s32 %s22, %s29
      %p146 = scmp.eq.s32.totalorder %s145, 0
      %s148 = sadd.s32 %s147, 1
      %s149 = scalar_select %p146, %s147, %s148
      %p152 = pneg %p146
      %p153 = scmp.eq.s32.totalorder %s22, 3
      %p154 = por %p152, %p153
      %p155 = scmp.ne.s32.totalorder %s147, %s150
      %p156 = scmp.eq.s32.totalorder %s22, 0
      %p157 = por %p155, %p156
      %p158 = scmp.ne.s32.totalorder %s147, %s150
      %p159 = scmp.eq.s32.totalorder %s27, 3
      %p160 = por %p158, %p159
      %p161 = scmp.ne.s32.totalorder %s150, %s151
      %p162 = scmp.eq.s32.totalorder %s27, 0
      %p163 = por %p161, %p162
      %p164 = scmp.ne.s32.totalorder %s150, %s151
      %p165 = scmp.eq.s32.totalorder %s28, 3
      %p166 = por %p164, %p165
      %p168 = scmp.ne.s32.totalorder %s151, %s167
      %p169 = scmp.eq.s32.totalorder %s28, 0
      %p170 = por %p168, %p169
      %p171 = scmp.le.s32.totalorder 1, %s22
      %p172 = scmp.lt.s32.totalorder %s22, 5
      %p173 = pnand %p171, %p172
      %p174 = pneg %p173
      // Predicated region
      $region9: #{tpu_custom_call.1} parent=5 // pred_check
        _
      $region10: #{tpu_custom_call.1} parent=5 // pred_check_branch
        %176 = sbr.rel (%p173) target = $region12
      $region11: #{tpu_custom_call.1} parent=5 // pred_region
        %s177 = ssub.s32 %s22, 1
        // Predicated region
        $region13: #{tpu_custom_call.1} parent=11 // pred_check
          %p178 = pneg %p69
        $region14: #{tpu_custom_call.1} parent=11 // pred_check_branch
          %180 = sbr.rel (%p178) target = $region16
        $region15: #{tpu_custom_call.1} parent=11 // pred_region
          %s182 = ssub.s32 2048, 2048
          %183 = vsyncadd [#allocation6], %s182
          %s184 = sshll.u32 [#allocation5], 4
          %s185 = int_to_ptr.vmem [resolvable:$true] %s184
          %190 = dma.hbm_to_vmem [thread:$0]  %s1, 2048, %s185, [#allocation6], 128, 128, 8
        $region16: #{tpu_custom_call.1} parent=11 // pred_fallthru
          _
        // Predicated region
        $region17: #{tpu_custom_call.1} parent=11 // pred_check
          %p191 = pneg %p90
        $region18: #{tpu_custom_call.1} parent=11 // pred_check_branch
          %193 = sbr.rel (%p191) target = $region20
        $region19: #{tpu_custom_call.1} parent=11 // pred_region
          %s195 = ssub.s32 2048, 2048
          %196 = vsyncadd [#allocation6], %s195
          %s197 = sshll.u32 [#allocation7], 4
          %s198 = int_to_ptr.vmem [resolvable:$true] %s197
          %203 = dma.hbm_to_vmem [thread:$0]  %s2, 2048, %s198, [#allocation6], 128, 128, 8
        $region20: #{tpu_custom_call.1} parent=11 // pred_fallthru
          _
        // Predicated region
        $region21: #{tpu_custom_call.1} parent=11 // pred_check
          %p204 = pneg %p111
        $region22: #{tpu_custom_call.1} parent=11 // pred_check_branch
          %206 = sbr.rel (%p204) target = $region24
        $region23: #{tpu_custom_call.1} parent=11 // pred_region
          _
        $region24: #{tpu_custom_call.1} parent=11 // pred_fallthru
          _
      $region12: #{tpu_custom_call.1} parent=5 // pred_fallthru
        _
      %p207 = scmp.lt.s32.totalorder %s22, 4
      // Predicated region
      $region25: #{tpu_custom_call.1} parent=5 // pred_check
        %p208 = pneg %p207
      $region26: #{tpu_custom_call.1} parent=5 // pred_check_branch
        %210 = sbr.rel (%p208) target = $region28
      $region27: #{tpu_custom_call.1} parent=5 // pred_region
        // Predicated region
        $region29: #{tpu_custom_call.1} parent=27 // pred_check
          %p211 = pneg %p42
        $region30: #{tpu_custom_call.1} parent=27 // pred_check_branch
          %213 = sbr.rel (%p211) target = $region32
        $region31: #{tpu_custom_call.1} parent=27 // pred_region
          %s214 = sand.u32 %s32, 1
          %s215 = scalar_lea.sflag [#allocation3], %s214
          %s216 = sand.u32 %s32, 1
          %s217 = smul.addr %s216, 16
          %s218 = scalar_lea.vmem [#allocation2], %s217
          %s219 = smul.u32 2, %s22
          %s221 = ssub.s32 256, 256
          %222 = vsyncadd %s215, %s221
          %s223 = smul.addr %s219, 128
          %s224 = scalar_lea.hbm %s0, %s223
          %s225 = sshll.u32 %s218, 4
          %s226 = int_to_ptr.vmem [resolvable:$true] %s225
          %231 = dma.hbm_to_vmem [thread:$0]  %s224, 256, %s226, %s215, 128, 128, 8
        $region32: #{tpu_custom_call.1} parent=27 // pred_fallthru
          _
      $region28: #{tpu_custom_call.1} parent=5 // pred_fallthru
        _
      %p232 = scmp.le.s32.totalorder 1, %s22
      %p233 = scmp.lt.s32.totalorder %s22, 5
      %p234 = pnand %p232, %p233
      %p235 = pneg %p234
      // Predicated region
      $region33: #{tpu_custom_call.1} parent=5 // pred_check
        _
      $region34: #{tpu_custom_call.1} parent=5 // pred_check_branch
        %237 = sbr.rel (%p234) target = $region36
      $region35: #{tpu_custom_call.1} parent=5 // pred_region
        %s238 = ssub.s32 %s22, 1
        %s239 = sand.u32 %s35, 1
        %s240 = scalar_lea.sflag [#allocation3], %s239
        %s241 = sand.u32 %s35, 1
        %s242 = smul.addr %s241, 16
        %s243 = scalar_lea.vmem [#allocation2], %s242
        // Predicated region
        $region37: #{tpu_custom_call.1} parent=35 // pred_check
          %p244 = pneg %p48
        $region38: #{tpu_custom_call.1} parent=35 // pred_check_branch
          %246 = sbr.rel (%p244) target = $region40
        $region39: #{tpu_custom_call.1} parent=35 // pred_region
          %247 = dma.done %s240, 256
        $region40: #{tpu_custom_call.1} parent=35 // pred_fallthru
          _
        // Predicated region
        $region41: #{tpu_custom_call.1} parent=35 // pred_check
          %p248 = pneg %p69
        $region42: #{tpu_custom_call.1} parent=35 // pred_check_branch
          %250 = sbr.rel (%p248) target = $region44
        $region43: #{tpu_custom_call.1} parent=35 // pred_region
          %251 = dma.done [#allocation6], 2048
        $region44: #{tpu_custom_call.1} parent=35 // pred_fallthru
          _
        // Predicated region
        $region45: #{tpu_custom_call.1} parent=35 // pred_check
          %p252 = pneg %p90
        $region46: #{tpu_custom_call.1} parent=35 // pred_check_branch
          %254 = sbr.rel (%p252) target = $region48
        $region47: #{tpu_custom_call.1} parent=35 // pred_region
          %255 = dma.done [#allocation6], 2048
        $region48: #{tpu_custom_call.1} parent=35 // pred_fallthru
          _
        %s256 = sand.u32 %s35, 1
        %s257 = scalar_lea.sflag [#allocation3], %s256
        %s258 = sand.u32 %s35, 1
        %s259 = smul.addr %s258, 16
        %s260 = scalar_lea.vmem [#allocation2], %s259
        %p261 = pneg %p48
        %p262 = pneg %p45
        %p263 = pneg %p69
        %p264 = pneg %p66
        %p265 = pneg %p90
        %p266 = pneg %p87
        %p267 = pneg %p111
        %p268 = pneg %p108
        %p269 = pneg %p137
        %p270 = pneg %p134
        %s271 = sand.u32 %s124, 1
        %s272 = scalar_lea.sflag [#allocation4], %s271
        %s273 = sand.u32 %s124, 1
        %s274 = smul.addr %s273, 16
        %s275 = scalar_lea.vmem [#allocation8], %s274
        %p276 = pneg %p163
        %p277 = pneg %p160
        %s278 = sand.u32 %s150, 1
        %s279 = scalar_lea.sflag [#allocation10], %s278
        %s280 = sand.u32 %s150, 1
        %s281 = smul.addr %s280, 16
        %s282 = scalar_lea.vmem [#allocation9], %s281
        %s283 = smul.u32 2, %s27
        %s284 = smul.u32 2, %s27
        %s285 = smul.u32 2, %s27
        %v286 = vld [vmem:[%s243] sm:$0xff]
        %v287 = vld [vmem:[%s243 + $0x8] sm:$0xff]
        %v288 = vld [vmem:[#allocation5] sm:$0xff]
        %v289 = vld [vmem:[#allocation5 + $0x8] sm:$0xff]
        %v290 = vld [vmem:[#allocation5 + $0x10] sm:$0xff]
        %v291 = vld [vmem:[#allocation5 + $0x18] sm:$0xff]
        %v292 = vld [vmem:[#allocation5 + $0x20] sm:$0xff]
        %v293 = vld [vmem:[#allocation5 + $0x28] sm:$0xff]
        %v294 = vld [vmem:[#allocation5 + $0x30] sm:$0xff]
        %v295 = vld [vmem:[#allocation5 + $0x38] sm:$0xff]
        %v296 = vld [vmem:[#allocation5 + $0x40] sm:$0xff]
        %v297 = vld [vmem:[#allocation5 + $0x48] sm:$0xff]
        %v298 = vld [vmem:[#allocation5 + $0x50] sm:$0xff]
        %v299 = vld [vmem:[#allocation5 + $0x58] sm:$0xff]
        %v300 = vld [vmem:[#allocation5 + $0x60] sm:$0xff]
        %v301 = vld [vmem:[#allocation5 + $0x68] sm:$0xff]
        %v302 = vld [vmem:[#allocation5 + $0x70] sm:$0xff]
        %v303 = vld [vmem:[#allocation5 + $0x78] sm:$0xff]
        %v304 = vld [vmem:[#allocation7] sm:$0xff]
        %v305 = vld [vmem:[#allocation7 + $0x8] sm:$0xff]
        %v306 = vld [vmem:[#allocation7 + $0x10] sm:$0xff]
        %v307 = vld [vmem:[#allocation7 + $0x18] sm:$0xff]
        %v308 = vld [vmem:[#allocation7 + $0x20] sm:$0xff]
        %v309 = vld [vmem:[#allocation7 + $0x28] sm:$0xff]
        %v310 = vld [vmem:[#allocation7 + $0x30] sm:$0xff]
        %v311 = vld [vmem:[#allocation7 + $0x38] sm:$0xff]
        %v312 = vld [vmem:[#allocation7 + $0x40] sm:$0xff]
        %v313 = vld [vmem:[#allocation7 + $0x48] sm:$0xff]
        %v314 = vld [vmem:[#allocation7 + $0x50] sm:$0xff]
        %v315 = vld [vmem:[#allocation7 + $0x58] sm:$0xff]
        %v316 = vld [vmem:[#allocation7 + $0x60] sm:$0xff]
        %v317 = vld [vmem:[#allocation7 + $0x68] sm:$0xff]
        %v318 = vld [vmem:[#allocation7 + $0x70] sm:$0xff]
        %v319 = vld [vmem:[#allocation7 + $0x78] sm:$0xff]
        %v320 = vld [vmem:[%s3] sm:$0x1]
        %v321 = vand.u32 2147483647, %v286
        %v322 = vand.u32 2147483647, %v287
        %323 = vmatprep.subr.mxu0 0.0
        %324 = vmatpush1.xpose.msra.mxu0 %v288
        %325 = vmatprep.subr.mxu0 0.0
        %326 = vmatpush1.xpose.msra.mxu0 %v289
        %327 = vmatprep.subr.mxu0 0.0
        %328 = vmatpush1.xpose.msra.mxu0 %v290
        %329 = vmatprep.subr.mxu0 0.0
        %330 = vmatpush1.xpose.msra.mxu0 %v291
        %331 = vmatprep.subr.mxu0 0.0
        %332 = vmatpush1.xpose.msra.mxu0 %v292
        %333 = vmatprep.subr.mxu0 0.0
        %334 = vmatpush1.xpose.msra.mxu0 %v293
        %335 = vmatprep.subr.mxu0 0.0
        %336 = vmatpush1.xpose.msra.mxu0 %v294
        %337 = vmatprep.subr.mxu0 0.0
        %338 = vmatpush1.xpose.msra.mxu0 %v295
        %339 = vmatprep.subr.mxu0 0.0
        %340 = vmatpush1.xpose.msra.mxu0 %v296
        %341 = vmatprep.subr.mxu0 0.0
        %342 = vmatpush1.xpose.msra.mxu0 %v297
        %343 = vmatprep.subr.mxu0 0.0
        %344 = vmatpush1.xpose.msra.mxu0 %v298
        %345 = vmatprep.subr.mxu0 0.0
        %346 = vmatpush1.xpose.msra.mxu0 %v299
        %347 = vmatprep.subr.mxu0 0.0
        %348 = vmatpush1.xpose.msra.mxu0 %v300
        %349 = vmatprep.subr.mxu0 0.0
        %350 = vmatpush1.xpose.msra.mxu0 %v301
        %351 = vmatprep.subr.mxu0 0.0
        %352 = vmatpush1.xpose.msra.mxu0 %v302
        %353 = vmatprep.subr.mxu0 0.0
        %354 = vmatpush1.xpose.msra.mxu0 %v303
        %355 = vmatprep.subr.mxu0 0.0
        %356 = vmatpush1.xpose.msra.mxu0 0.0
        %357 = vmatprep.subr.mxu0 0.0
        %358 = vmatpush1.xpose.msra.mxu0 0.0
        %359 = vmatprep.subr.mxu0 0.0
        %360 = vmatpush1.xpose.msra.mxu0 0.0
        %361 = vmatprep.subr.mxu0 0.0
        %362 = vmatpush1.xpose.msra.mxu0 0.0
        %363 = vmatprep.subr.mxu0 0.0
        %364 = vmatpush1.xpose.msra.mxu0 0.0
        %365 = vmatprep.subr.mxu0 0.0
        %366 = vmatpush1.xpose.msra.mxu0 0.0
        %367 = vmatprep.subr.mxu0 0.0
        %368 = vmatpush1.xpose.msra.mxu0 0.0
        %369 = vmatprep.subr.mxu0 0.0
        %370 = vmatpush1.xpose.msra.mxu0 0.0
        %371 = vmatprep.subr.mxu0 0.0
        %372 = vmatpush1.xpose.msra.mxu0 0.0
        %373 = vmatprep.subr.mxu0 0.0
        %374 = vmatpush1.xpose.msra.mxu0 0.0
        %375 = vmatprep.subr.mxu0 0.0
        %376 = vmatpush1.xpose.msra.mxu0 0.0
        %377 = vmatprep.subr.mxu0 0.0
        %378 = vmatpush1.xpose.msra.mxu0 0.0
        %379 = vmatprep.subr.mxu0 0.0
        %380 = vmatpush1.xpose.msra.mxu0 0.0
        %381 = vmatprep.subr.mxu0 0.0
        %382 = vmatpush1.xpose.msra.mxu0 0.0
        %383 = vmatprep.subr.mxu0 0.0
        %384 = vmatpush1.xpose.msra.mxu0 0.0
        %385 = vmatprep.subr.mxu0 0.0
        %386 = vmatpush1.xpose.msra.mxu0 0.0
        %387 = vmatprep.mubr.f32.mxu0 0.0
        %388 = vmatmul.mubr.f32.gmra.mrb[0].mxu0 %v286
        %v389 = vpop.f32.mrb[0].mxu0
        %v390 = vadd.f32 0.0, %v389
        %v391 = vpop.f32.mrb[0].mxu0
        %392 = vmatprep.mubr.f32.mxu0 0.0
        %393 = vmatmul.mubr.f32.gmra.mrb[0].mxu0 %v287
        %v394 = vpop.f32.mrb[0].mxu0
        %v395 = vadd.f32 0.0, %v394
        %v396 = vpop.f32.mrb[0].mxu0
        %397 = vdwg.mxu0
        %398 = vmatprep.subr.mxu0 0.0
        %399 = vmatpush1.xpose.msra.mxu0 %v304
        %400 = vmatprep.subr.mxu0 0.0
        %401 = vmatpush1.xpose.msra.mxu0 %v305
        %402 = vmatprep.subr.mxu0 0.0
        %403 = vmatpush1.xpose.msra.mxu0 %v306
        %404 = vmatprep.subr.mxu0 0.0
        %405 = vmatpush1.xpose.msra.mxu0 %v307
        %406 = vmatprep.subr.mxu0 0.0
        %407 = vmatpush1.xpose.msra.mxu0 %v308
        %408 = vmatprep.subr.mxu0 0.0
        %409 = vmatpush1.xpose.msra.mxu0 %v309
        %410 = vmatprep.subr.mxu0 0.0
        %411 = vmatpush1.xpose.msra.mxu0 %v310
        %412 = vmatprep.subr.mxu0 0.0
        %413 = vmatpush1.xpose.msra.mxu0 %v311
        %414 = vmatprep.subr.mxu0 0.0
        %415 = vmatpush1.xpose.msra.mxu0 %v312
        %416 = vmatprep.subr.mxu0 0.0
        %417 = vmatpush1.xpose.msra.mxu0 %v313
        %418 = vmatprep.subr.mxu0 0.0
        %419 = vmatpush1.xpose.msra.mxu0 %v314
        %420 = vmatprep.subr.mxu0 0.0
        %421 = vmatpush1.xpose.msra.mxu0 %v315
        %422 = vmatprep.subr.mxu0 0.0
        %423 = vmatpush1.xpose.msra.mxu0 %v316
        %424 = vmatprep.subr.mxu0 0.0
        %425 = vmatpush1.xpose.msra.mxu0 %v317
        %426 = vmatprep.subr.mxu0 0.0
        %427 = vmatpush1.xpose.msra.mxu0 %v318
        %428 = vmatprep.subr.mxu0 0.0
        %429 = vmatpush1.xpose.msra.mxu0 %v319
        %430 = vmatprep.subr.mxu0 0.0
        %431 = vmatpush1.xpose.msra.mxu0 0.0
        %432 = vmatprep.subr.mxu0 0.0
        %433 = vmatpush1.xpose.msra.mxu0 0.0
        %434 = vmatprep.subr.mxu0 0.0
        %435 = vmatpush1.xpose.msra.mxu0 0.0
        %436 = vmatprep.subr.mxu0 0.0
        %437 = vmatpush1.xpose.msra.mxu0 0.0
        %438 = vmatprep.subr.mxu0 0.0
        %439 = vmatpush1.xpose.msra.mxu0 0.0
        %440 = vmatprep.subr.mxu0 0.0
        %441 = vmatpush1.xpose.msra.mxu0 0.0
        %442 = vmatprep.subr.mxu0 0.0
        %443 = vmatpush1.xpose.msra.mxu0 0.0
        %444 = vmatprep.subr.mxu0 0.0
        %445 = vmatpush1.xpose.msra.mxu0 0.0
        %446 = vmatprep.subr.mxu0 0.0
        %447 = vmatpush1.xpose.msra.mxu0 0.0
        %448 = vmatprep.subr.mxu0 0.0
        %449 = vmatpush1.xpose.msra.mxu0 0.0
        %450 = vmatprep.subr.mxu0 0.0
        %451 = vmatpush1.xpose.msra.mxu0 0.0
        %452 = vmatprep.subr.mxu0 0.0
        %453 = vmatpush1.xpose.msra.mxu0 0.0
        %454 = vmatprep.subr.mxu0 0.0
        %455 = vmatpush1.xpose.msra.mxu0 0.0
        %456 = vmatprep.subr.mxu0 0.0
        %457 = vmatpush1.xpose.msra.mxu0 0.0
        %458 = vmatprep.subr.mxu0 0.0
        %459 = vmatpush1.xpose.msra.mxu0 0.0
        %460 = vmatprep.subr.mxu0 0.0
        %461 = vmatpush1.xpose.msra.mxu0 0.0
        %462 = vmatprep.mubr.f32.mxu0 0.0
        %463 = vmatmul.mubr.f32.gmra.mrb[0].mxu0 %v321
        %v464 = vpop.f32.mrb[0].mxu0
        %v465 = vadd.f32 0.0, %v464
        %v466 = vpop.f32.mrb[0].mxu0
        %467 = vmatprep.mubr.f32.mxu0 0.0
        %468 = vmatmul.mubr.f32.gmra.mrb[0].mxu0 %v322
        %v469 = vpop.f32.mrb[0].mxu0
        %v470 = vadd.f32 0.0, %v469
        %v471 = vpop.f32.mrb[0].mxu0
        %472 = vdwg.mxu0
        %v474 = vlaneseq
        %v475 = vshrl.u32 %v474, 7
        %v476 = vsub.s32 0, %v475
        %v477 = vrot.slane %v320, %v476
        %v479 = vadd.f32 %v390, %v477
        %v480 = vadd.f32 %v395, %v477
        %481 = vst [vmem:[%s275] sm:$0xff] %v479
        %482 = vst [vmem:[%s275 + $0x8] sm:$0xff] %v480
        %483 = vmax.xlane.f32.xlu0 %v479
        %v484 = vpop.xlane.xlu0 %483
        %485 = vmax.xlane.f32.xlu0 %v480
        %v486 = vpop.xlane.xlu0 %485
        %v487 = vsub.f32 %v479, %v484
        %v488 = vsub.f32 %v480, %v486
        %v489 = vmul.f32 %v487, 1.442695
        %v490 = vpow.pop %v489
        %v491 = vmul.f32 %v488, 1.442695
        %v492 = vpow.pop %v491
        %493 = vadd.xlane.f32.xlu0 %v490
        %v494 = vpop.xlane.xlu0 %493
        %495 = vadd.xlane.f32.xlu0 %v492
        %v496 = vpop.xlane.xlu0 %495
        %v497 = vrcp.pop %v494
        %v498 = vmul.f32 %v490, %v497
        %v499 = vrcp.pop %v496
        %v500 = vmul.f32 %v492, %v499
        %v501 = vadd.f32 %v390, %v465
        %v502 = vadd.f32 %v395, %v470
        %v503 = vmul.f32 %v501, 0.5
        %v504 = vmul.f32 %v502, 0.5
        %v505 = vsub.f32 %v390, %v465
        %v506 = vsub.f32 %v395, %v470
        %v507 = vmul.f32 %v505, 0.5
        %v508 = vmul.f32 %v506, 0.5
        %vm509 = vcmp.ge.f32.partialorder %v503, 0.0
        %vm510 = vcmp.ge.f32.partialorder %v504, 0.0
        %v511 = vsel %vm509, 1e-06, -1e-06
        %v512 = vsel %vm510, 1e-06, -1e-06
        %v513 = vadd.f32 %v503, %v511
        %v514 = vadd.f32 %v504, %v512
        %vm515 = vcmp.ge.f32.partialorder %v507, 0.0
        %vm516 = vcmp.ge.f32.partialorder %v508, 0.0
        %v517 = vsel %vm515, 1e-06, -1e-06
        %v518 = vsel %vm516, 1e-06, -1e-06
        %v519 = vadd.f32 %v507, %v517
        %v520 = vadd.f32 %v508, %v518
        %v521 = vrcp.pop %v513
        %v522 = vmul.f32 %v498, %v521
        %v523 = vrcp.pop %v514
        %v524 = vmul.f32 %v500, %v523
        %v525 = vrcp.pop %v519
        %v526 = vmul.f32 %v498, %v525
        %v527 = vrcp.pop %v520
        %v528 = vmul.f32 %v500, %v527
        %529 = vmatprep.subr.mxu0 0.0
        %530 = vmatpush1.msra.mxu0 %v288
        %531 = vmatprep.subr.mxu0 0.0
        %532 = vmatpush1.msra.mxu0 %v289
        %533 = vmatprep.subr.mxu0 0.0
        %534 = vmatpush1.msra.mxu0 %v290
        %535 = vmatprep.subr.mxu0 0.0
        %536 = vmatpush1.msra.mxu0 %v291
        %537 = vmatprep.subr.mxu0 0.0
        %538 = vmatpush1.msra.mxu0 %v292
        %539 = vmatprep.subr.mxu0 0.0
        %540 = vmatpush1.msra.mxu0 %v293
        %541 = vmatprep.subr.mxu0 0.0
        %542 = vmatpush1.msra.mxu0 %v294
        %543 = vmatprep.subr.mxu0 0.0
        %544 = vmatpush1.msra.mxu0 %v295
        %545 = vmatprep.subr.mxu0 0.0
        %546 = vmatpush1.msra.mxu0 %v296
        %547 = vmatprep.subr.mxu0 0.0
        %548 = vmatpush1.msra.mxu0 %v297
        %549 = vmatprep.subr.mxu0 0.0
        %550 = vmatpush1.msra.mxu0 %v298
        %551 = vmatprep.subr.mxu0 0.0
        %552 = vmatpush1.msra.mxu0 %v299
        %553 = vmatprep.subr.mxu0 0.0
        %554 = vmatpush1.msra.mxu0 %v300
        %555 = vmatprep.subr.mxu0 0.0
        %556 = vmatpush1.msra.mxu0 %v301
        %557 = vmatprep.subr.mxu0 0.0
        %558 = vmatpush1.msra.mxu0 %v302
        %559 = vmatprep.subr.mxu0 0.0
        %560 = vmatpush1.msra.mxu0 %v303
        %561 = vmatprep.subr.mxu0 0.0
        %562 = vmatpush1.msra.mxu0 0.0
        %563 = vmatprep.subr.mxu0 0.0
        %564 = vmatpush1.msra.mxu0 0.0
        %565 = vmatprep.subr.mxu0 0.0
        %566 = vmatpush1.msra.mxu0 0.0
        %567 = vmatprep.subr.mxu0 0.0
        %568 = vmatpush1.msra.mxu0 0.0
        %569 = vmatprep.subr.mxu0 0.0
        %570 = vmatpush1.msra.mxu0 0.0
        %571 = vmatprep.subr.mxu0 0.0
        %572 = vmatpush1.msra.mxu0 0.0
        %573 = vmatprep.subr.mxu0 0.0
        %574 = vmatpush1.msra.mxu0 0.0
        %575 = vmatprep.subr.mxu0 0.0
        %576 = vmatpush1.msra.mxu0 0.0
        %577 = vmatprep.subr.mxu0 0.0
        %578 = vmatpush1.msra.mxu0 0.0
        %579 = vmatprep.subr.mxu0 0.0
        %580 = vmatpush1.msra.mxu0 0.0
        %581 = vmatprep.subr.mxu0 0.0
        %582 = vmatpush1.msra.mxu0 0.0
        %583 = vmatprep.subr.mxu0 0.0
        %584 = vmatpush1.msra.mxu0 0.0
        %585 = vmatprep.subr.mxu0 0.0
        %586 = vmatpush1.msra.mxu0 0.0
        %587 = vmatprep.subr.mxu0 0.0
        %588 = vmatpush1.msra.mxu0 0.0
        %589 = vmatprep.subr.mxu0 0.0
        %590 = vmatpush1.msra.mxu0 0.0
        %591 = vmatprep.subr.mxu0 0.0
        %592 = vmatpush1.msra.mxu0 0.0
        %593 = vmatprep.mubr.f32.mxu0 0.0
        %594 = vmatmul.mubr.f32.gmra.mrb[0].mxu0 %v522
        %v595 = vpop.f32.mrb[0].mxu0
        %v596 = vadd.f32 0.0, %v595
        %v597 = vpop.f32.mrb[0].mxu0
        %598 = vmatprep.mubr.f32.mxu0 0.0
        %599 = vmatmul.mubr.f32.gmra.mrb[0].mxu0 %v524
        %v600 = vpop.f32.mrb[0].mxu0
        %v601 = vadd.f32 0.0, %v600
        %v602 = vpop.f32.mrb[0].mxu0
        %603 = vmatprep.mubr.f32.mxu0 0.0
        %604 = vmatmul.mubr.f32.gmra.mrb[0].mxu0 %v526
        %v605 = vpop.f32.mrb[0].mxu0
        %v606 = vadd.f32 0.0, %v605
        %v607 = vpop.f32.mrb[0].mxu0
        %608 = vmatprep.mubr.f32.mxu0 0.0
        %609 = vmatmul.mubr.f32.gmra.mrb[0].mxu0 %v528
        %v610 = vpop.f32.mrb[0].mxu0
        %v611 = vadd.f32 0.0, %v610
        %v612 = vpop.f32.mrb[0].mxu0
        %613 = vdwg.mxu0
        %614 = vmatprep.subr.mxu0 0.0
        %615 = vmatpush1.msra.mxu0 %v304
        %616 = vmatprep.subr.mxu0 0.0
        %617 = vmatpush1.msra.mxu0 %v305
        %618 = vmatprep.subr.mxu0 0.0
        %619 = vmatpush1.msra.mxu0 %v306
        %620 = vmatprep.subr.mxu0 0.0
        %621 = vmatpush1.msra.mxu0 %v307
        %622 = vmatprep.subr.mxu0 0.0
        %623 = vmatpush1.msra.mxu0 %v308
        %624 = vmatprep.subr.mxu0 0.0
        %625 = vmatpush1.msra.mxu0 %v309
        %626 = vmatprep.subr.mxu0 0.0
        %627 = vmatpush1.msra.mxu0 %v310
        %628 = vmatprep.subr.mxu0 0.0
        %629 = vmatpush1.msra.mxu0 %v311
        %630 = vmatprep.subr.mxu0 0.0
        %631 = vmatpush1.msra.mxu0 %v312
        %632 = vmatprep.subr.mxu0 0.0
        %633 = vmatpush1.msra.mxu0 %v313
        %634 = vmatprep.subr.mxu0 0.0
        %635 = vmatpush1.msra.mxu0 %v314
        %636 = vmatprep.subr.mxu0 0.0
        %637 = vmatpush1.msra.mxu0 %v315
        %638 = vmatprep.subr.mxu0 0.0
        %639 = vmatpush1.msra.mxu0 %v316
        %640 = vmatprep.subr.mxu0 0.0
        %641 = vmatpush1.msra.mxu0 %v317
        %642 = vmatprep.subr.mxu0 0.0
        %643 = vmatpush1.msra.mxu0 %v318
        %644 = vmatprep.subr.mxu0 0.0
        %645 = vmatpush1.msra.mxu0 %v319
        %646 = vmatprep.subr.mxu0 0.0
        %647 = vmatpush1.msra.mxu0 0.0
        %648 = vmatprep.subr.mxu0 0.0
        %649 = vmatpush1.msra.mxu0 0.0
        %650 = vmatprep.subr.mxu0 0.0
        %651 = vmatpush1.msra.mxu0 0.0
        %652 = vmatprep.subr.mxu0 0.0
        %653 = vmatpush1.msra.mxu0 0.0
        %654 = vmatprep.subr.mxu0 0.0
        %655 = vmatpush1.msra.mxu0 0.0
        %656 = vmatprep.subr.mxu0 0.0
        %657 = vmatpush1.msra.mxu0 0.0
        %658 = vmatprep.subr.mxu0 0.0
        %659 = vmatpush1.msra.mxu0 0.0
        %660 = vmatprep.subr.mxu0 0.0
        %661 = vmatpush1.msra.mxu0 0.0
        %662 = vmatprep.subr.mxu0 0.0
        %663 = vmatpush1.msra.mxu0 0.0
        %664 = vmatprep.subr.mxu0 0.0
        %665 = vmatpush1.msra.mxu0 0.0
        %666 = vmatprep.subr.mxu0 0.0
        %667 = vmatpush1.msra.mxu0 0.0
        %668 = vmatprep.subr.mxu0 0.0
        %669 = vmatpush1.msra.mxu0 0.0
        %670 = vmatprep.subr.mxu0 0.0
        %671 = vmatpush1.msra.mxu0 0.0
        %672 = vmatprep.subr.mxu0 0.0
        %673 = vmatpush1.msra.mxu0 0.0
        %674 = vmatprep.subr.mxu0 0.0
        %675 = vmatpush1.msra.mxu0 0.0
        %676 = vmatprep.subr.mxu0 0.0
        %677 = vmatpush1.msra.mxu0 0.0
        %678 = vmatprep.mubr.f32.mxu0 0.0
        %679 = vmatmul.mubr.f32.gmra.mrb[0].mxu0 %v522
        %v680 = vpop.f32.mrb[0].mxu0
        %v681 = vadd.f32 0.0, %v680
        %v682 = vpop.f32.mrb[0].mxu0
        %683 = vmatprep.mubr.f32.mxu0 0.0
        %684 = vmatmul.mubr.f32.gmra.mrb[0].mxu0 %v524
        %v685 = vpop.f32.mrb[0].mxu0
        %v686 = vadd.f32 0.0, %v685
        %v687 = vpop.f32.mrb[0].mxu0
        %688 = vmatprep.mubr.f32.mxu0 0.0
        %689 = vmatmul.mubr.f32.gmra.mrb[0].mxu0 %v526
        %v690 = vpop.f32.mrb[0].mxu0
        %v691 = vadd.f32 0.0, %v690
        %v692 = vpop.f32.mrb[0].mxu0
        %693 = vmatprep.mubr.f32.mxu0 0.0
        %694 = vmatmul.mubr.f32.gmra.mrb[0].mxu0 %v528
        %v695 = vpop.f32.mrb[0].mxu0
        %v696 = vadd.f32 0.0, %v695
        %v697 = vpop.f32.mrb[0].mxu0
        %698 = vdwg.mxu0
        %v699 = vmul.f32 %v286, %v596
        %v700 = vmul.f32 %v287, %v601
        %v701 = vmul.f32 %v321, %v681
        %v702 = vmul.f32 %v322, %v686
        %v703 = vadd.f32 %v699, %v701
        %v704 = vadd.f32 %v700, %v702
        %v705 = vmul.f32 %v703, 0.5
        %v706 = vmul.f32 %v704, 0.5
        %v707 = vmul.f32 %v286, %v606
        %v708 = vmul.f32 %v287, %v611
        %v709 = vmul.f32 %v321, %v691
        %v710 = vmul.f32 %v322, %v696
        %v711 = vsub.f32 %v707, %v709
        %v712 = vsub.f32 %v708, %v710
        %v713 = vmul.f32 %v711, 0.5
        %v714 = vmul.f32 %v712, 0.5
        %v715 = vmul.f32 %v705, 2.0
        %v716 = vmul.f32 %v706, 2.0
        %v717 = vsub.f32 %v715, %v713
        %v718 = vsub.f32 %v716, %v714
        %719 = vst [vmem:[%s282] sm:$0xff] %v717
        %720 = vst [vmem:[%s282 + $0x8] sm:$0xff] %v718
        %s721 = sand.u32 %s124, 1
        %s722 = scalar_lea.sflag [#allocation4], %s721
        %s723 = sand.u32 %s124, 1
        %s724 = smul.addr %s723, 16
        %s725 = scalar_lea.vmem [#allocation8], %s724
        %s726 = sand.u32 %s150, 1
        %s727 = scalar_lea.sflag [#allocation10], %s726
        %s728 = sand.u32 %s150, 1
        %s729 = smul.addr %s728, 16
        %s730 = scalar_lea.vmem [#allocation9], %s729
        // Predicated region
        $region49: #{tpu_custom_call.1} parent=35 // pred_check
          %p731 = pneg %p134
        $region50: #{tpu_custom_call.1} parent=35 // pred_check_branch
          %733 = sbr.rel (%p731) target = $region52
        $region51: #{tpu_custom_call.1} parent=35 // pred_region
          %s734 = smul.u32 2, %s27
          %s736 = ssub.s32 256, 256
          %737 = vsyncadd %s722, %s736
          %s738 = smul.addr %s734, 128
          %s739 = scalar_lea.hbm %s4, %s738
          %s740 = sshll.u32 %s725, 4
          %s741 = int_to_ptr.vmem [resolvable:$true] %s740
          %746 = dma.vmem_to_hbm [thread:$0]  %s741, 256, %s739, %s722, 128, 128, 8
        $region52: #{tpu_custom_call.1} parent=35 // pred_fallthru
          _
        // Predicated region
        $region53: #{tpu_custom_call.1} parent=35 // pred_check
          %p747 = pneg %p160
        $region54: #{tpu_custom_call.1} parent=35 // pred_check_branch
          %749 = sbr.rel (%p747) target = $region56
        $region55: #{tpu_custom_call.1} parent=35 // pred_region
          %s750 = smul.u32 2, %s27
          %s752 = ssub.s32 256, 256
          %753 = vsyncadd %s727, %s752
          %s754 = smul.addr %s750, 128
          %s755 = scalar_lea.hbm %s5, %s754
          %s756 = sshll.u32 %s730, 4
          %s757 = int_to_ptr.vmem [resolvable:$true] %s756
          %762 = dma.vmem_to_hbm [thread:$0]  %s757, 256, %s755, %s727, 128, 128, 8
        $region56: #{tpu_custom_call.1} parent=35 // pred_fallthru
          _
      $region36: #{tpu_custom_call.1} parent=5 // pred_fallthru
        _
      %p763 = scmp.le.s32.totalorder 2, %s22
      // Predicated region
      $region57: #{tpu_custom_call.1} parent=5 // pred_check
        %p764 = pneg %p763
      $region58: #{tpu_custom_call.1} parent=5 // pred_check_branch
        %766 = sbr.rel (%p764) target = $region60
      $region59: #{tpu_custom_call.1} parent=5 // pred_region
        %s767 = ssub.s32 %s22, 2
        // Predicated region
        $region61: #{tpu_custom_call.1} parent=59 // pred_check
          %p768 = pneg %p140
        $region62: #{tpu_custom_call.1} parent=59 // pred_check_branch
          %770 = sbr.rel (%p768) target = $region64
        $region63: #{tpu_custom_call.1} parent=59 // pred_region
          %s771 = sand.u32 %s125, 1
          %s772 = scalar_lea.sflag [#allocation4], %s771
          %s773 = sand.u32 %s125, 1
          %s774 = smul.addr %s773, 16
          %s775 = scalar_lea.vmem [#allocation8], %s774
          %776 = dma.done %s772, 256
        $region64: #{tpu_custom_call.1} parent=59 // pred_fallthru
          _
        // Predicated region
        $region65: #{tpu_custom_call.1} parent=59 // pred_check
          %p777 = pneg %p166
        $region66: #{tpu_custom_call.1} parent=59 // pred_check_branch
          %779 = sbr.rel (%p777) target = $region68
        $region67: #{tpu_custom_call.1} parent=59 // pred_region
          %s780 = sand.u32 %s151, 1
          %s781 = scalar_lea.sflag [#allocation10], %s780
          %s782 = sand.u32 %s151, 1
          %s783 = smul.addr %s782, 16
          %s784 = scalar_lea.vmem [#allocation9], %s783
          %785 = dma.done %s781, 256
        $region68: #{tpu_custom_call.1} parent=59 // pred_fallthru
          _
      $region60: #{tpu_custom_call.1} parent=5 // pred_fallthru
        _
    $region6: #{tpu_custom_call.1} parent=1 // loop_footer
      %s26 = sadd.s32 1, %s22
    $region7: #{tpu_custom_call.1} parent=1 // loop_footer_branch
      %21 = sbr.rel target = $region3
    $region8: #{tpu_custom_call.1} parent=1 // loop_exit
      _
    %786 = vsyncpa [#allocation3], 1
    %s787 = scalar_lea.sflag [#allocation3], 1
    %788 = vsyncpa %s787, 1
    %789 = vsyncpa [#allocation6], 1
    %790 = vsyncpa [#allocation4], 1
    %s791 = scalar_lea.sflag [#allocation4], 1
    %792 = vsyncpa %s791, 1
    %793 = vsyncpa [#allocation10], 1
    %s794 = scalar_lea.sflag [#allocation10], 1
    %795 = vsyncpa %s794, 1

</llo_original>
